<compile_context>
chip_gen: v5e
topology: v5e:2x2
jax: 0.10.0
libtpu: 0.0.40
codegen_flags: <defaults>
</compile_context>

<pallas_src>
import numpy as np

import jax
import jax.numpy as jnp
from jax.experimental import pallas as pl
from jax.experimental.pallas import tpu as pltpu


_CONVS = ((16, 5, 2), (32, 5, 2), (48, 3, 1))   # (out_channels, kernel, stride)
_CIN = 3


def _round_up(x, m):
    return ((x + m - 1) // m) * m


def _conv_ref(x, w_oihw, b, stride):
    y = jax.lax.conv_general_dilated(
        x, w_oihw, window_strides=(stride, stride), padding="VALID",
        dimension_numbers=("NCHW", "OIHW", "NCHW"),
        precision=jax.lax.Precision.HIGHEST)
    return y + b.reshape(1, -1, 1, 1)


def _effective_conv_geometry():
    (_, k1, s1), (_, k2, s2), (_, k3, _s3) = _CONVS
    k_eff = k1 + (k2 - 1) * s1 + (k3 - 1) * s1 * s2        # 21
    s_eff = s1 * s2 * _s3                                   # 4
    return k_eff, s_eff


# ----------------------------- Pallas kernel --------------------------------

def _cnn_matmul_kernel(p_ref, w_ref, b_ref, out_ref):
    # One full-width MXU matmul: (M_pad, K_pad) bf16 x (K_pad, 128) bf16 -> f32,
    # then a single broadcast bias add. Output store is lane-dense (128 lanes).
    out_ref[...] = (
        jnp.dot(p_ref[...], w_ref[...], preferred_element_type=jnp.float32)
        + b_ref[...]
    )


# ------------------------------ parameters ----------------------------------

def init_cnn_params(key):
    """Torch-style init (OIHW), plus the init-time composed effective conv."""
    (c1, k1, s1), (c2, k2, s2), (c3, k3, s3) = _CONVS

    def conv_init(k, cout, cin, ksz):
        kw_, kb_ = jax.random.split(k)
        bound = 1.0 / np.sqrt(cin * ksz * ksz)
        w = jax.random.uniform(kw_, (cout, cin, ksz, ksz), jnp.float32, -bound, bound)
        b = jax.random.uniform(kb_, (cout,), jnp.float32, -bound, bound)
        return w, b

    kk1, kk2, kk3 = jax.random.split(key, 3)
    w1, b1 = conv_init(kk1, c1, _CIN, k1)
    w2, b2 = conv_init(kk2, c2, c1, k2)
    w3, b3 = conv_init(kk3, c3, c2, k3)

    # -------- compose conv3 . conv2 . conv1 into ONE effective conv ---------
    k_eff, _ = _effective_conv_geometry()
    kdim = k_eff * k_eff * _CIN                              # 1323

    zeros1, zeros2, zeros3 = (jnp.zeros_like(b1), jnp.zeros_like(b2),
                              jnp.zeros_like(b3))

    def stack(x, with_bias):
        x = _conv_ref(x, w1, b1 if with_bias else zeros1, s1)
        x = _conv_ref(x, w2, b2 if with_bias else zeros2, s2)
        x = _conv_ref(x, w3, b3 if with_bias else zeros3, s3)
        return x

    # Basis images: one 21x21x3 delta per flattened patch index, ordered
    # (kh, kw, cin) to match the wrapper's im2col ordering. Each basis image
    # produces exactly one output position, so stack(e_q) is row q of W_eff.
    basis = jnp.eye(kdim, dtype=jnp.float32).reshape(kdim, k_eff, k_eff, _CIN)
    basis = jnp.transpose(basis, (0, 3, 1, 2))               # (K, Cin, 21, 21) NCHW
    w_comp = stack(basis, with_bias=False).reshape(kdim, c3)  # (1323, 48) f32
    b_comp = stack(jnp.zeros((1, _CIN, k_eff, k_eff), jnp.float32),
                   with_bias=True).reshape(c3)               # (48,)  (b1,b2,b3 folded)

    kpad = _round_up(kdim, 128)                              # 1408
    cpad = 128                                               # lane-dense output
    w_pad = jnp.zeros((kpad, cpad), jnp.float32).at[:kdim, :c3].set(w_comp)
    b_pad = jnp.zeros((1, cpad), jnp.float32).at[0, :c3].set(b_comp)

    return {
        "w_eff": w_pad.astype(jnp.bfloat16),                 # (1408, 128) bf16
        "b_eff": b_pad,                                      # (1, 128)    f32
        # OIHW copies for the pure-XLA reference check.
        "w1_oihw": w1, "b1": b1,
        "w2_oihw": w2, "b2": b2,
        "w3_oihw": w3, "b3": b3,
    }


# ------------------------------ forward pass ---------------------------------

def cnn_forward(params, x_nchw):
    """Replicates cnn.forward: conv1 -> conv2 -> conv3 -> flatten (NCHW order)."""
    n, cin, h, w = x_nchw.shape
    c3 = _CONVS[2][0]
    k_eff, s_eff = _effective_conv_geometry()
    oh = (h - k_eff) // s_eff + 1
    ow = (w - k_eff) // s_eff + 1

    # im2col of the raw input for the composed conv, K ordered (kh, kw, cin).
    x = jnp.transpose(x_nchw, (0, 2, 3, 1))                  # NCHW -> NHWC
    row = jnp.arange(oh)[:, None] * s_eff + jnp.arange(k_eff)[None, :]   # (OH, Ke)
    col = jnp.arange(ow)[:, None] * s_eff + jnp.arange(k_eff)[None, :]   # (OW, Ke)
    p = x[:, row, :, :]                                      # (N, OH, Ke, W, C)
    p = p[:, :, :, col, :]                                    # (N, OH, Ke, OW, Ke, C)
    p = jnp.transpose(p, (0, 1, 3, 2, 4, 5))                  # (N, OH, OW, Ke, Ke, C)

    m = n * oh * ow
    kdim = k_eff * k_eff * cin
    p = p.reshape(m, kdim)

    kpad, cpad = params["w_eff"].shape                        # (1408, 128)
    mpad = max(_round_up(m, 16), 16)                          # bf16 sublane friendly
    p = jnp.pad(p, ((0, mpad - m), (0, kpad - kdim))).astype(jnp.bfloat16)

    bytes_accessed = (p.size * 2 + int(np.prod(params["w_eff"].shape)) * 2
                      + int(np.prod(params["b_eff"].shape)) * 4 + mpad * cpad * 4)

    out_slab = pl.pallas_call(
        _cnn_matmul_kernel,
        out_shape=jax.ShapeDtypeStruct((mpad, cpad), jnp.float32),
        # No grid, no double buffering: single invocation, everything VMEM-resident.
        in_specs=[pl.BlockSpec(memory_space=pltpu.MemorySpace.VMEM)] * 3,
        out_specs=pl.BlockSpec(memory_space=pltpu.MemorySpace.VMEM),
        cost_estimate=pl.CostEstimate(flops=2 * mpad * kpad * cpad,
                                      transcendentals=0,
                                      bytes_accessed=int(bytes_accessed)),
    )(p, params["w_eff"], params["b_eff"])

    out = out_slab[:m, :c3].reshape(n, oh, ow, c3)            # valid rows/lanes
    out = jnp.transpose(out, (0, 3, 1, 2))                    # NHWC -> NCHW
    return out.reshape(-1)                                    # torch .flatten()


# ------------------------- pure-XLA reference --------------------------------

def cnn_forward_ref(params, x_nchw):
    x = _conv_ref(x_nchw, params["w1_oihw"], params["b1"], 2)
    x = _conv_ref(x, params["w2_oihw"], params["b2"], 2)
    x = _conv_ref(x, params["w3_oihw"], params["b3"], 1)
    return x.reshape(-1)
    # TODO(synk): the torch module's `print(x.shape)` debug side-effect is omitted.


if __name__ == "__main__":
    key = jax.random.PRNGKey(0)
    k_param, k_x = jax.random.split(key)

    # 29x29 RGB input: conv1(5,s2)->13x13 (matches dims=[13,13]),
    # conv2(5,s2)->5x5, conv3(3,s1)->3x3. Flatten length = 2*48*3*3 = 864.
    x = jax.random.normal(k_x, (2, 3, 29, 29), dtype=jnp.float32)
    params = init_cnn_params(k_param)

    fwd = jax.jit(cnn_forward)
    out = jax.block_until_ready(fwd(params, x))

    ref = cnn_forward_ref(params, x)
    assert out.shape == ref.shape == (2 * 48 * 3 * 3,)
    # Kernel uses bf16 MXU operands with f32 accumulation (and a single composed
    # matmul, so fewer bf16 round-trips than the layered version); compare against
    # the f32 HIGHEST reference with a bf16-level tolerance.
    assert jnp.allclose(out, ref, rtol=2e-2, atol=2e-2), "mismatch vs XLA conv reference"

    print("KERNEL_OK")
</pallas_src>

<mosaic_0001>
module attributes {stable_mosaic.version = 11 : i64} {
  func.func @_cnn_matmul_kernel(%arg0: memref<32x1408xbf16, #tpu.memory_space<vmem>>, %arg1: memref<1408x128xbf16, #tpu.memory_space<vmem>>, %arg2: memref<1x128xf32, #tpu.memory_space<vmem>>, %arg3: memref<32x128xf32, #tpu.memory_space<vmem>>) attributes {dimension_semantics = [], scalar_prefetch = 0 : i64, scratch_operands = 0 : i64, tpu.core_type = #tpu.core_type<tc>} {
    %c0 = arith.constant 0 : index
    %c0_0 = arith.constant 0 : index
    %0 = vector.load %arg0[%c0, %c0_0] : memref<32x1408xbf16, #tpu.memory_space<vmem>>, vector<32x1408xbf16>
    %c0_1 = arith.constant 0 : index
    %c0_2 = arith.constant 0 : index
    %1 = vector.load %arg1[%c0_1, %c0_2] : memref<1408x128xbf16, #tpu.memory_space<vmem>>, vector<1408x128xbf16>
    %cst = arith.constant dense<0.000000e+00> : vector<32x128xf32>
    %2 = tpu.matmul %0, %1, %cst {dimension_numbers = #tpu.dot_dimension_numbers<[1], [0], [0], [1], [0, 0, 1, 1], [], []>} : vector<32x1408xbf16>, vector<1408x128xbf16>, vector<32x128xf32> -> vector<32x128xf32>
    %c0_3 = arith.constant 0 : index
    %c0_4 = arith.constant 0 : index
    %3 = vector.load %arg2[%c0_3, %c0_4] : memref<1x128xf32, #tpu.memory_space<vmem>>, vector<1x128xf32>
    %4 = vector.broadcast %3 : vector<1x128xf32> to vector<32x128xf32>
    %5 = arith.addf %2, %4 : vector<32x128xf32>
    %c0_5 = arith.constant 0 : index
    %c0_6 = arith.constant 0 : index
    %6 = vector.load %arg3[%c0_5, %c0_6] : memref<32x128xf32, #tpu.memory_space<vmem>>, vector<32x128xf32>
    tpu.vector_store %arg3[%c0_5, %c0_6], %5 {strides = array<i32>} : memref<32x128xf32, #tpu.memory_space<vmem>>, vector<32x128xf32>,
    return
  }
}

</mosaic_0001>

<llo_original>
// kernel: cnn_forward.1
$region0: #{cnn_forward.1}
  #allocation0 [shape = 'u32[]', space=smem, size = 0x4, offset = 0x4, fixed_abs, tag = 'smem constant byte address 0x4 - core index']
  #allocation1 [shape = 'u32[72,128]{1,0:T(1,128)}', space=vmem, size = 0x9000, scoped, tag = 'internal scratch']
  %s0 = inlined_call_operand.vmem [shape: bf16[32,1408], index: 0, kind: input, shape index: {}]
  %s1 = inlined_call_operand.vmem [shape: bf16[1408,128], index: 1, kind: input, shape index: {}]
  %s2 = inlined_call_operand.vmem [shape: f32[1,128], index: 2, kind: input, shape index: {}]
  %s3 = inlined_call_operand.vmem [shape: f32[32,128], index: 3, kind: output, shape index: {}]
  %s4 = sld [smem:[#allocation0]]
  $region22: #{cnn_forward.1} parent=0
    _
  %s6 = ssub.s32 1, %s4
  %s7 = scalar_select 0, %s6, %s4
  // Predicated region
  $region2: #{cnn_forward.1} parent=0 // pred_check
    _
  $region3: #{cnn_forward.1} parent=0 // pred_check_branch
    %9 = sbr.rel (0) target = $region5
  $region4: #{cnn_forward.1} parent=0 // pred_region
    _
  $region5: #{cnn_forward.1} parent=0 // pred_fallthru
    _
  // Predicated region
  $region6: #{cnn_forward.1} parent=0 // pred_check
    _
  $region7: #{cnn_forward.1} parent=0 // pred_check_branch
    %11 = sbr.rel (0) target = $region9
  $region8: #{cnn_forward.1} parent=0 // pred_region
    _
  $region9: #{cnn_forward.1} parent=0 // pred_fallthru
    _
  // Predicated region
  $region10: #{cnn_forward.1} parent=0 // pred_check
    _
  $region11: #{cnn_forward.1} parent=0 // pred_check_branch
    %13 = sbr.rel (0) target = $region13
  $region12: #{cnn_forward.1} parent=0 // pred_region
    _
  $region13: #{cnn_forward.1} parent=0 // pred_fallthru
    _
  %v14 = vld [vmem:[%s0] sm:$0xff]
  %v15 = vld [vmem:[%s0 + $0x8] sm:$0xff]
  %v16 = vld [vmem:[%s0 + $0x10] sm:$0xff]
  %v17 = vld [vmem:[%s0 + $0x18] sm:$0xff]
  %v18 = vld [vmem:[%s0 + $0x20] sm:$0xff]
  %v19 = vld [vmem:[%s0 + $0x28] sm:$0xf]
  %v20 = vld [vmem:[%s0 + $0x2c] sm:$0xff]
  %v21 = vld [vmem:[%s0 + $0x34] sm:$0xff]
  %v22 = vld [vmem:[%s0 + $0x3c] sm:$0xff]
  %v23 = vld [vmem:[%s0 + $0x44] sm:$0xff]
  %v24 = vld [vmem:[%s0 + $0x4c] sm:$0xff]
  %v25 = vld [vmem:[%s0 + $0x54] sm:$0xf]
  %v26 = vld [vmem:[%s0 + $0x58] sm:$0xff]
  %v27 = vld [vmem:[%s0 + $0x60] sm:$0xff]
  %v28 = vld [vmem:[%s0 + $0x68] sm:$0xff]
  %v29 = vld [vmem:[%s0 + $0x70] sm:$0xff]
  %v30 = vld [vmem:[%s0 + $0x78] sm:$0xff]
  %v31 = vld [vmem:[%s0 + $0x80] sm:$0xf]
  %v32 = vld [vmem:[%s0 + $0x84] sm:$0xff]
  %v33 = vld [vmem:[%s0 + $0x8c] sm:$0xff]
  %v34 = vld [vmem:[%s0 + $0x94] sm:$0xff]
  %v35 = vld [vmem:[%s0 + $0x9c] sm:$0xff]
  %v36 = vld [vmem:[%s0 + $0xa4] sm:$0xff]
  %v37 = vld [vmem:[%s0 + $0xac] sm:$0xf]
  %v38 = vld [vmem:[%s1] sm:$0xf]
  %v39 = vld [vmem:[%s1 + $0x4] sm:$0xf]
  %v40 = vld [vmem:[%s1 + $0x8] sm:$0xf]
  %v41 = vld [vmem:[%s1 + $0xc] sm:$0xf]
  %v42 = vld [vmem:[%s1 + $0x10] sm:$0xf]
  %v43 = vld [vmem:[%s1 + $0x14] sm:$0xf]
  %v44 = vld [vmem:[%s1 + $0x18] sm:$0xf]
  %v45 = vld [vmem:[%s1 + $0x1c] sm:$0xf]
  %v46 = vld [vmem:[%s1 + $0x20] sm:$0xf]
  %v47 = vld [vmem:[%s1 + $0x24] sm:$0xf]
  %v48 = vld [vmem:[%s1 + $0x28] sm:$0xf]
  %v49 = vld [vmem:[%s1 + $0x2c] sm:$0xf]
  %v50 = vld [vmem:[%s1 + $0x30] sm:$0xf]
  %v51 = vld [vmem:[%s1 + $0x34] sm:$0xf]
  %v52 = vld [vmem:[%s1 + $0x38] sm:$0xf]
  %v53 = vld [vmem:[%s1 + $0x3c] sm:$0xf]
  %v54 = vld [vmem:[%s1 + $0x40] sm:$0xf]
  %v55 = vld [vmem:[%s1 + $0x44] sm:$0xf]
  %v56 = vld [vmem:[%s1 + $0x48] sm:$0xf]
  %v57 = vld [vmem:[%s1 + $0x4c] sm:$0xf]
  %v58 = vld [vmem:[%s1 + $0x50] sm:$0xf]
  %v59 = vld [vmem:[%s1 + $0x54] sm:$0xf]
  %v60 = vld [vmem:[%s1 + $0x58] sm:$0xf]
  %v61 = vld [vmem:[%s1 + $0x5c] sm:$0xf]
  %v62 = vld [vmem:[%s1 + $0x60] sm:$0xf]
  %v63 = vld [vmem:[%s1 + $0x64] sm:$0xf]
  %v64 = vld [vmem:[%s1 + $0x68] sm:$0xf]
  %v65 = vld [vmem:[%s1 + $0x6c] sm:$0xf]
  %v66 = vld [vmem:[%s1 + $0x70] sm:$0xf]
  %v67 = vld [vmem:[%s1 + $0x74] sm:$0xf]
  %v68 = vld [vmem:[%s1 + $0x78] sm:$0xf]
  %v69 = vld [vmem:[%s1 + $0x7c] sm:$0xf]
  %v70 = vld [vmem:[%s1 + $0x80] sm:$0xf]
  %v71 = vld [vmem:[%s1 + $0x84] sm:$0xf]
  %v72 = vld [vmem:[%s1 + $0x88] sm:$0xf]
  %v73 = vld [vmem:[%s1 + $0x8c] sm:$0xf]
  %v74 = vld [vmem:[%s1 + $0x90] sm:$0xf]
  %v75 = vld [vmem:[%s1 + $0x94] sm:$0xf]
  %v76 = vld [vmem:[%s1 + $0x98] sm:$0xf]
  %v77 = vld [vmem:[%s1 + $0x9c] sm:$0xf]
  %v78 = vld [vmem:[%s1 + $0xa0] sm:$0xf]
  %v79 = vld [vmem:[%s1 + $0xa4] sm:$0xf]
  %v80 = vld [vmem:[%s1 + $0xa8] sm:$0xf]
  %v81 = vld [vmem:[%s1 + $0xac] sm:$0xf]
  %v82 = vld [vmem:[%s1 + $0xb0] sm:$0xf]
  %v83 = vld [vmem:[%s1 + $0xb4] sm:$0xf]
  %v84 = vld [vmem:[%s1 + $0xb8] sm:$0xf]
  %v85 = vld [vmem:[%s1 + $0xbc] sm:$0xf]
  %v86 = vld [vmem:[%s1 + $0xc0] sm:$0xf]
  %v87 = vld [vmem:[%s1 + $0xc4] sm:$0xf]
  %v88 = vld [vmem:[%s1 + $0xc8] sm:$0xf]
  %v89 = vld [vmem:[%s1 + $0xcc] sm:$0xf]
  %v90 = vld [vmem:[%s1 + $0xd0] sm:$0xf]
  %v91 = vld [vmem:[%s1 + $0xd4] sm:$0xf]
  %v92 = vld [vmem:[%s1 + $0xd8] sm:$0xf]
  %v93 = vld [vmem:[%s1 + $0xdc] sm:$0xf]
  %v94 = vld [vmem:[%s1 + $0xe0] sm:$0xf]
  %v95 = vld [vmem:[%s1 + $0xe4] sm:$0xf]
  %v96 = vld [vmem:[%s1 + $0xe8] sm:$0xf]
  %v97 = vld [vmem:[%s1 + $0xec] sm:$0xf]
  %v98 = vld [vmem:[%s1 + $0xf0] sm:$0xf]
  %v99 = vld [vmem:[%s1 + $0xf4] sm:$0xf]
  %v100 = vld [vmem:[%s1 + $0xf8] sm:$0xf]
  %v101 = vld [vmem:[%s1 + $0xfc] sm:$0xf]
  %v102 = vld [vmem:[%s1 + $0x100] sm:$0xf]
  %v103 = vld [vmem:[%s1 + $0x104] sm:$0xf]
  %v104 = vld [vmem:[%s1 + $0x108] sm:$0xf]
  %v105 = vld [vmem:[%s1 + $0x10c] sm:$0xf]
  %v106 = vld [vmem:[%s1 + $0x110] sm:$0xf]
  %v107 = vld [vmem:[%s1 + $0x114] sm:$0xf]
  %v108 = vld [vmem:[%s1 + $0x118] sm:$0xf]
  %v109 = vld [vmem:[%s1 + $0x11c] sm:$0xf]
  %v110 = vld [vmem:[%s1 + $0x120] sm:$0xf]
  %v111 = vld [vmem:[%s1 + $0x124] sm:$0xf]
  %v112 = vld [vmem:[%s1 + $0x128] sm:$0xf]
  %v113 = vld [vmem:[%s1 + $0x12c] sm:$0xf]
  %v114 = vld [vmem:[%s1 + $0x130] sm:$0xf]
  %v115 = vld [vmem:[%s1 + $0x134] sm:$0xf]
  %v116 = vld [vmem:[%s1 + $0x138] sm:$0xf]
  %v117 = vld [vmem:[%s1 + $0x13c] sm:$0xf]
  %v118 = vld [vmem:[%s1 + $0x140] sm:$0xf]
  %v119 = vld [vmem:[%s1 + $0x144] sm:$0xf]
  %v120 = vld [vmem:[%s1 + $0x148] sm:$0xf]
  %v121 = vld [vmem:[%s1 + $0x14c] sm:$0xf]
  %v122 = vld [vmem:[%s1 + $0x150] sm:$0xf]
  %v123 = vld [vmem:[%s1 + $0x154] sm:$0xf]
  %v124 = vld [vmem:[%s1 + $0x158] sm:$0xf]
  %v125 = vld [vmem:[%s1 + $0x15c] sm:$0xf]
  %v126 = vld [vmem:[%s1 + $0x160] sm:$0xf]
  %v127 = vld [vmem:[%s1 + $0x164] sm:$0xf]
  %v128 = vld [vmem:[%s1 + $0x168] sm:$0xf]
  %v129 = vld [vmem:[%s1 + $0x16c] sm:$0xf]
  %v130 = vld [vmem:[%s1 + $0x170] sm:$0xf]
  %v131 = vld [vmem:[%s1 + $0x174] sm:$0xf]
  %v132 = vld [vmem:[%s1 + $0x178] sm:$0xf]
  %v133 = vld [vmem:[%s1 + $0x17c] sm:$0xf]
  %v134 = vld [vmem:[%s1 + $0x180] sm:$0xf]
  %v135 = vld [vmem:[%s1 + $0x184] sm:$0xf]
  %v136 = vld [vmem:[%s1 + $0x188] sm:$0xf]
  %v137 = vld [vmem:[%s1 + $0x18c] sm:$0xf]
  %v138 = vld [vmem:[%s1 + $0x190] sm:$0xf]
  %v139 = vld [vmem:[%s1 + $0x194] sm:$0xf]
  %v140 = vld [vmem:[%s1 + $0x198] sm:$0xf]
  %v141 = vld [vmem:[%s1 + $0x19c] sm:$0xf]
  %v142 = vld [vmem:[%s1 + $0x1a0] sm:$0xf]
  %v143 = vld [vmem:[%s1 + $0x1a4] sm:$0xf]
  %v144 = vld [vmem:[%s1 + $0x1a8] sm:$0xf]
  %v145 = vld [vmem:[%s1 + $0x1ac] sm:$0xf]
  %v146 = vld [vmem:[%s1 + $0x1b0] sm:$0xf]
  %v147 = vld [vmem:[%s1 + $0x1b4] sm:$0xf]
  %v148 = vld [vmem:[%s1 + $0x1b8] sm:$0xf]
  %v149 = vld [vmem:[%s1 + $0x1bc] sm:$0xf]
  %v150 = vld [vmem:[%s1 + $0x1c0] sm:$0xf]
  %v151 = vld [vmem:[%s1 + $0x1c4] sm:$0xf]
  %v152 = vld [vmem:[%s1 + $0x1c8] sm:$0xf]
  %v153 = vld [vmem:[%s1 + $0x1cc] sm:$0xf]
  %v154 = vld [vmem:[%s1 + $0x1d0] sm:$0xf]
  %v155 = vld [vmem:[%s1 + $0x1d4] sm:$0xf]
  %v156 = vld [vmem:[%s1 + $0x1d8] sm:$0xf]
  %v157 = vld [vmem:[%s1 + $0x1dc] sm:$0xf]
  %v158 = vld [vmem:[%s1 + $0x1e0] sm:$0xf]
  %v159 = vld [vmem:[%s1 + $0x1e4] sm:$0xf]
  %v160 = vld [vmem:[%s1 + $0x1e8] sm:$0xf]
  %v161 = vld [vmem:[%s1 + $0x1ec] sm:$0xf]
  %v162 = vld [vmem:[%s1 + $0x1f0] sm:$0xf]
  %v163 = vld [vmem:[%s1 + $0x1f4] sm:$0xf]
  %v164 = vld [vmem:[%s1 + $0x1f8] sm:$0xf]
  %v165 = vld [vmem:[%s1 + $0x1fc] sm:$0xf]
  %v166 = vld [vmem:[%s1 + $0x200] sm:$0xf]
  %v167 = vld [vmem:[%s1 + $0x204] sm:$0xf]
  %v168 = vld [vmem:[%s1 + $0x208] sm:$0xf]
  %v169 = vld [vmem:[%s1 + $0x20c] sm:$0xf]
  %v170 = vld [vmem:[%s1 + $0x210] sm:$0xf]
  %v171 = vld [vmem:[%s1 + $0x214] sm:$0xf]
  %v172 = vld [vmem:[%s1 + $0x218] sm:$0xf]
  %v173 = vld [vmem:[%s1 + $0x21c] sm:$0xf]
  %v174 = vld [vmem:[%s1 + $0x220] sm:$0xf]
  %v175 = vld [vmem:[%s1 + $0x224] sm:$0xf]
  %v176 = vld [vmem:[%s1 + $0x228] sm:$0xf]
  %v177 = vld [vmem:[%s1 + $0x22c] sm:$0xf]
  %v178 = vld [vmem:[%s1 + $0x230] sm:$0xf]
  %v179 = vld [vmem:[%s1 + $0x234] sm:$0xf]
  %v180 = vld [vmem:[%s1 + $0x238] sm:$0xf]
  %v181 = vld [vmem:[%s1 + $0x23c] sm:$0xf]
  %v182 = vld [vmem:[%s1 + $0x240] sm:$0xf]
  %v183 = vld [vmem:[%s1 + $0x244] sm:$0xf]
  %v184 = vld [vmem:[%s1 + $0x248] sm:$0xf]
  %v185 = vld [vmem:[%s1 + $0x24c] sm:$0xf]
  %v186 = vld [vmem:[%s1 + $0x250] sm:$0xf]
  %v187 = vld [vmem:[%s1 + $0x254] sm:$0xf]
  %v188 = vld [vmem:[%s1 + $0x258] sm:$0xf]
  %v189 = vld [vmem:[%s1 + $0x25c] sm:$0xf]
  %v190 = vld [vmem:[%s1 + $0x260] sm:$0xf]
  %v191 = vld [vmem:[%s1 + $0x264] sm:$0xf]
  %v192 = vld [vmem:[%s1 + $0x268] sm:$0xf]
  %v193 = vld [vmem:[%s1 + $0x26c] sm:$0xf]
  %v194 = vld [vmem:[%s1 + $0x270] sm:$0xf]
  %v195 = vld [vmem:[%s1 + $0x274] sm:$0xf]
  %v196 = vld [vmem:[%s1 + $0x278] sm:$0xf]
  %v197 = vld [vmem:[%s1 + $0x27c] sm:$0xf]
  %v198 = vld [vmem:[%s1 + $0x280] sm:$0xf]
  %v199 = vld [vmem:[%s1 + $0x284] sm:$0xf]
  %v200 = vld [vmem:[%s1 + $0x288] sm:$0xf]
  %v201 = vld [vmem:[%s1 + $0x28c] sm:$0xf]
  %v202 = vld [vmem:[%s1 + $0x290] sm:$0xf]
  %v203 = vld [vmem:[%s1 + $0x294] sm:$0xf]
  %v204 = vld [vmem:[%s1 + $0x298] sm:$0xf]
  %v205 = vld [vmem:[%s1 + $0x29c] sm:$0xf]
  %v206 = vld [vmem:[%s1 + $0x2a0] sm:$0xf]
  %v207 = vld [vmem:[%s1 + $0x2a4] sm:$0xf]
  %v208 = vld [vmem:[%s1 + $0x2a8] sm:$0xf]
  %v209 = vld [vmem:[%s1 + $0x2ac] sm:$0xf]
  %v210 = vld [vmem:[%s1 + $0x2b0] sm:$0xf]
  %v211 = vld [vmem:[%s1 + $0x2b4] sm:$0xf]
  %v212 = vld [vmem:[%s1 + $0x2b8] sm:$0xf]
  %v213 = vld [vmem:[%s1 + $0x2bc] sm:$0xf]
  %v214 = vld [vmem:[%s2] sm:$0x1]
  %v216 = vperm.slane %v214, 0
  %v242 = vunpack.c.l.b16 %v14
  %v243 = vunpack.c.h.b16 %v14
  %v244 = vunpack.c.l.b16 %v15
  %v245 = vunpack.c.h.b16 %v15
  %v246 = vunpack.c.l.b16 %v16
  %v247 = vunpack.c.h.b16 %v16
  %v248 = vunpack.c.l.b16 %v17
  %v249 = vunpack.c.h.b16 %v17
  %v250 = vunpack.c.l.b16 %v18
  %v251 = vunpack.c.h.b16 %v18
  %v252 = vunpack.c.l.b16 %v19
  %v253 = vunpack.c.l.b16 %v20
  %v254 = vunpack.c.h.b16 %v20
  %v255 = vunpack.c.l.b16 %v21
  %v256 = vunpack.c.h.b16 %v21
  %v257 = vunpack.c.l.b16 %v22
  %v258 = vunpack.c.h.b16 %v22
  %v259 = vunpack.c.l.b16 %v23
  %v260 = vunpack.c.h.b16 %v23
  %v261 = vunpack.c.l.b16 %v24
  %v262 = vunpack.c.h.b16 %v24
  %v263 = vunpack.c.l.b16 %v25
  %v264 = vunpack.c.l.b16 %v26
  %v265 = vunpack.c.h.b16 %v26
  %v266 = vunpack.c.l.b16 %v27
  %v267 = vunpack.c.h.b16 %v27
  %v268 = vunpack.c.l.b16 %v28
  %v269 = vunpack.c.h.b16 %v28
  %v270 = vunpack.c.l.b16 %v29
  %v271 = vunpack.c.h.b16 %v29
  %v272 = vunpack.c.l.b16 %v30
  %v273 = vunpack.c.h.b16 %v30
  %v274 = vunpack.c.l.b16 %v31
  %v275 = vunpack.c.l.b16 %v32
  %v276 = vunpack.c.h.b16 %v32
  %v277 = vunpack.c.l.b16 %v33
  %v278 = vunpack.c.h.b16 %v33
  %v279 = vunpack.c.l.b16 %v34
  %v280 = vunpack.c.h.b16 %v34
  %v281 = vunpack.c.l.b16 %v35
  %v282 = vunpack.c.h.b16 %v35
  %v283 = vunpack.c.l.b16 %v36
  %v284 = vunpack.c.h.b16 %v36
  %v285 = vunpack.c.l.b16 %v37
  %v286 = vpack.c.b16 %v253, %v242
  %v287 = vpack.c.b16 %v254, %v243
  %v288 = vpack.c.b16 %v255, %v244
  %v289 = vpack.c.b16 %v256, %v245
  %v290 = vpack.c.b16 %v257, %v246
  %v291 = vpack.c.b16 %v258, %v247
  %v292 = vpack.c.b16 %v259, %v248
  %v293 = vpack.c.b16 %v260, %v249
  %v294 = vpack.c.b16 %v261, %v250
  %v295 = vpack.c.b16 %v262, %v251
  %v296 = vpack.c.b16 %v263, %v252
  %v297 = vpack.c.b16 %v275, %v264
  %v298 = vpack.c.b16 %v276, %v265
  %v299 = vpack.c.b16 %v277, %v266
  %v300 = vpack.c.b16 %v278, %v267
  %v301 = vpack.c.b16 %v279, %v268
  %v302 = vpack.c.b16 %v280, %v269
  %v303 = vpack.c.b16 %v281, %v270
  %v304 = vpack.c.b16 %v282, %v271
  %v305 = vpack.c.b16 %v283, %v272
  %v306 = vpack.c.b16 %v284, %v273
  %v307 = vpack.c.b16 %v285, %v274
  %v506 = vunpack.c.l.b16 %v38
  %v507 = vunpack.c.l.b16 %v39
  %v508 = vunpack.c.l.b16 %v40
  %v509 = vunpack.c.l.b16 %v41
  %v510 = vunpack.c.l.b16 %v42
  %v511 = vunpack.c.l.b16 %v43
  %v512 = vunpack.c.l.b16 %v44
  %v513 = vunpack.c.l.b16 %v45
  %v514 = vunpack.c.l.b16 %v46
  %v515 = vunpack.c.l.b16 %v47
  %v516 = vunpack.c.l.b16 %v48
  %v517 = vunpack.c.l.b16 %v49
  %v518 = vunpack.c.l.b16 %v50
  %v519 = vunpack.c.l.b16 %v51
  %v520 = vunpack.c.l.b16 %v52
  %v521 = vunpack.c.l.b16 %v53
  %v522 = vunpack.c.l.b16 %v54
  %v523 = vunpack.c.l.b16 %v55
  %v524 = vunpack.c.l.b16 %v56
  %v525 = vunpack.c.l.b16 %v57
  %v526 = vunpack.c.l.b16 %v58
  %v527 = vunpack.c.l.b16 %v59
  %v528 = vunpack.c.l.b16 %v60
  %v529 = vunpack.c.l.b16 %v61
  %v530 = vunpack.c.l.b16 %v62
  %v531 = vunpack.c.l.b16 %v63
  %v532 = vunpack.c.l.b16 %v64
  %v533 = vunpack.c.l.b16 %v65
  %v534 = vunpack.c.l.b16 %v66
  %v535 = vunpack.c.l.b16 %v67
  %v536 = vunpack.c.l.b16 %v68
  %v537 = vunpack.c.l.b16 %v69
  %v538 = vunpack.c.l.b16 %v70
  %v539 = vunpack.c.l.b16 %v71
  %v540 = vunpack.c.l.b16 %v72
  %v541 = vunpack.c.l.b16 %v73
  %v542 = vunpack.c.l.b16 %v74
  %v543 = vunpack.c.l.b16 %v75
  %v544 = vunpack.c.l.b16 %v76
  %v545 = vunpack.c.l.b16 %v77
  %v546 = vunpack.c.l.b16 %v78
  %v547 = vunpack.c.l.b16 %v79
  %v548 = vunpack.c.l.b16 %v80
  %v549 = vunpack.c.l.b16 %v81
  %v550 = vunpack.c.l.b16 %v82
  %v551 = vunpack.c.l.b16 %v83
  %v552 = vunpack.c.l.b16 %v84
  %v553 = vunpack.c.l.b16 %v85
  %v554 = vunpack.c.l.b16 %v86
  %v555 = vunpack.c.l.b16 %v87
  %v556 = vunpack.c.l.b16 %v88
  %v557 = vunpack.c.l.b16 %v89
  %v558 = vunpack.c.l.b16 %v90
  %v559 = vunpack.c.l.b16 %v91
  %v560 = vunpack.c.l.b16 %v92
  %v561 = vunpack.c.l.b16 %v93
  %v562 = vunpack.c.l.b16 %v94
  %v563 = vunpack.c.l.b16 %v95
  %v564 = vunpack.c.l.b16 %v96
  %v565 = vunpack.c.l.b16 %v97
  %v566 = vunpack.c.l.b16 %v98
  %v567 = vunpack.c.l.b16 %v99
  %v568 = vunpack.c.l.b16 %v100
  %v569 = vunpack.c.l.b16 %v101
  %v570 = vunpack.c.l.b16 %v102
  %v571 = vunpack.c.l.b16 %v103
  %v572 = vunpack.c.l.b16 %v104
  %v573 = vunpack.c.l.b16 %v105
  %v574 = vunpack.c.l.b16 %v106
  %v575 = vunpack.c.l.b16 %v107
  %v576 = vunpack.c.l.b16 %v108
  %v577 = vunpack.c.l.b16 %v109
  %v578 = vunpack.c.l.b16 %v110
  %v579 = vunpack.c.l.b16 %v111
  %v580 = vunpack.c.l.b16 %v112
  %v581 = vunpack.c.l.b16 %v113
  %v582 = vunpack.c.l.b16 %v114
  %v583 = vunpack.c.l.b16 %v115
  %v584 = vunpack.c.l.b16 %v116
  %v585 = vunpack.c.l.b16 %v117
  %v586 = vunpack.c.l.b16 %v118
  %v587 = vunpack.c.l.b16 %v119
  %v588 = vunpack.c.l.b16 %v120
  %v589 = vunpack.c.l.b16 %v121
  %v590 = vunpack.c.l.b16 %v122
  %v591 = vunpack.c.l.b16 %v123
  %v592 = vunpack.c.l.b16 %v124
  %v593 = vunpack.c.l.b16 %v125
  %v594 = vunpack.c.l.b16 %v126
  %v595 = vunpack.c.l.b16 %v127
  %v596 = vunpack.c.l.b16 %v128
  %v597 = vunpack.c.l.b16 %v129
  %v598 = vunpack.c.l.b16 %v130
  %v599 = vunpack.c.l.b16 %v131
  %v600 = vunpack.c.l.b16 %v132
  %v601 = vunpack.c.l.b16 %v133
  %v602 = vunpack.c.l.b16 %v134
  %v603 = vunpack.c.l.b16 %v135
  %v604 = vunpack.c.l.b16 %v136
  %v605 = vunpack.c.l.b16 %v137
  %v606 = vunpack.c.l.b16 %v138
  %v607 = vunpack.c.l.b16 %v139
  %v608 = vunpack.c.l.b16 %v140
  %v609 = vunpack.c.l.b16 %v141
  %v610 = vunpack.c.l.b16 %v142
  %v611 = vunpack.c.l.b16 %v143
  %v612 = vunpack.c.l.b16 %v144
  %v613 = vunpack.c.l.b16 %v145
  %v614 = vunpack.c.l.b16 %v146
  %v615 = vunpack.c.l.b16 %v147
  %v616 = vunpack.c.l.b16 %v148
  %v617 = vunpack.c.l.b16 %v149
  %v618 = vunpack.c.l.b16 %v150
  %v619 = vunpack.c.l.b16 %v151
  %v620 = vunpack.c.l.b16 %v152
  %v621 = vunpack.c.l.b16 %v153
  %v622 = vunpack.c.l.b16 %v154
  %v623 = vunpack.c.l.b16 %v155
  %v624 = vunpack.c.l.b16 %v156
  %v625 = vunpack.c.l.b16 %v157
  %v626 = vunpack.c.l.b16 %v158
  %v627 = vunpack.c.l.b16 %v159
  %v628 = vunpack.c.l.b16 %v160
  %v629 = vunpack.c.l.b16 %v161
  %v630 = vunpack.c.l.b16 %v162
  %v631 = vunpack.c.l.b16 %v163
  %v632 = vunpack.c.l.b16 %v164
  %v633 = vunpack.c.l.b16 %v165
  %v634 = vunpack.c.l.b16 %v166
  %v635 = vunpack.c.l.b16 %v167
  %v636 = vunpack.c.l.b16 %v168
  %v637 = vunpack.c.l.b16 %v169
  %v638 = vunpack.c.l.b16 %v170
  %v639 = vunpack.c.l.b16 %v171
  %v640 = vunpack.c.l.b16 %v172
  %v641 = vunpack.c.l.b16 %v173
  %v642 = vunpack.c.l.b16 %v174
  %v643 = vunpack.c.l.b16 %v175
  %v644 = vunpack.c.l.b16 %v176
  %v645 = vunpack.c.l.b16 %v177
  %v646 = vunpack.c.l.b16 %v178
  %v647 = vunpack.c.l.b16 %v179
  %v648 = vunpack.c.l.b16 %v180
  %v649 = vunpack.c.l.b16 %v181
  %v650 = vunpack.c.l.b16 %v182
  %v651 = vunpack.c.l.b16 %v183
  %v652 = vunpack.c.l.b16 %v184
  %v653 = vunpack.c.l.b16 %v185
  %v654 = vunpack.c.l.b16 %v186
  %v655 = vunpack.c.l.b16 %v187
  %v656 = vunpack.c.l.b16 %v188
  %v657 = vunpack.c.l.b16 %v189
  %v658 = vunpack.c.l.b16 %v190
  %v659 = vunpack.c.l.b16 %v191
  %v660 = vunpack.c.l.b16 %v192
  %v661 = vunpack.c.l.b16 %v193
  %v662 = vunpack.c.l.b16 %v194
  %v663 = vunpack.c.l.b16 %v195
  %v664 = vunpack.c.l.b16 %v196
  %v665 = vunpack.c.l.b16 %v197
  %v666 = vunpack.c.l.b16 %v198
  %v667 = vunpack.c.l.b16 %v199
  %v668 = vunpack.c.l.b16 %v200
  %v669 = vunpack.c.l.b16 %v201
  %v670 = vunpack.c.l.b16 %v202
  %v671 = vunpack.c.l.b16 %v203
  %v672 = vunpack.c.l.b16 %v204
  %v673 = vunpack.c.l.b16 %v205
  %v674 = vunpack.c.l.b16 %v206
  %v675 = vunpack.c.l.b16 %v207
  %v676 = vunpack.c.l.b16 %v208
  %v677 = vunpack.c.l.b16 %v209
  %v678 = vunpack.c.l.b16 %v210
  %v679 = vunpack.c.l.b16 %v211
  %v680 = vunpack.c.l.b16 %v212
  %v681 = vunpack.c.l.b16 %v213
  %v682 = vpack.c.b16 %v507, %v506
  %v683 = vpack.c.b16 %v509, %v508
  %v684 = vpack.c.b16 %v511, %v510
  %v685 = vpack.c.b16 %v513, %v512
  %v686 = vpack.c.b16 %v515, %v514
  %v687 = vpack.c.b16 %v517, %v516
  %v688 = vpack.c.b16 %v519, %v518
  %v689 = vpack.c.b16 %v521, %v520
  %v690 = vpack.c.b16 %v523, %v522
  %v691 = vpack.c.b16 %v525, %v524
  %v692 = vpack.c.b16 %v527, %v526
  %v693 = vpack.c.b16 %v529, %v528
  %v694 = vpack.c.b16 %v531, %v530
  %v695 = vpack.c.b16 %v533, %v532
  %v696 = vpack.c.b16 %v535, %v534
  %v697 = vpack.c.b16 %v537, %v536
  %v698 = vpack.c.b16 %v539, %v538
  %v699 = vpack.c.b16 %v541, %v540
  %v700 = vpack.c.b16 %v543, %v542
  %v701 = vpack.c.b16 %v545, %v544
  %v702 = vpack.c.b16 %v547, %v546
  %v703 = vpack.c.b16 %v549, %v548
  %v704 = vpack.c.b16 %v551, %v550
  %v705 = vpack.c.b16 %v553, %v552
  %v706 = vpack.c.b16 %v555, %v554
  %v707 = vpack.c.b16 %v557, %v556
  %v708 = vpack.c.b16 %v559, %v558
  %v709 = vpack.c.b16 %v561, %v560
  %v710 = vpack.c.b16 %v563, %v562
  %v711 = vpack.c.b16 %v565, %v564
  %v712 = vpack.c.b16 %v567, %v566
  %v713 = vpack.c.b16 %v569, %v568
  %v714 = vpack.c.b16 %v571, %v570
  %v715 = vpack.c.b16 %v573, %v572
  %v716 = vpack.c.b16 %v575, %v574
  %v717 = vpack.c.b16 %v577, %v576
  %v718 = vpack.c.b16 %v579, %v578
  %v719 = vpack.c.b16 %v581, %v580
  %v720 = vpack.c.b16 %v583, %v582
  %v721 = vpack.c.b16 %v585, %v584
  %v722 = vpack.c.b16 %v587, %v586
  %v723 = vpack.c.b16 %v589, %v588
  %v724 = vpack.c.b16 %v591, %v590
  %v725 = vpack.c.b16 %v593, %v592
  %v726 = vpack.c.b16 %v595, %v594
  %v727 = vpack.c.b16 %v597, %v596
  %v728 = vpack.c.b16 %v599, %v598
  %v729 = vpack.c.b16 %v601, %v600
  %v730 = vpack.c.b16 %v603, %v602
  %v731 = vpack.c.b16 %v605, %v604
  %v732 = vpack.c.b16 %v607, %v606
  %v733 = vpack.c.b16 %v609, %v608
  %v734 = vpack.c.b16 %v611, %v610
  %v735 = vpack.c.b16 %v613, %v612
  %v736 = vpack.c.b16 %v615, %v614
  %v737 = vpack.c.b16 %v617, %v616
  %v738 = vpack.c.b16 %v619, %v618
  %v739 = vpack.c.b16 %v621, %v620
  %v740 = vpack.c.b16 %v623, %v622
  %v741 = vpack.c.b16 %v625, %v624
  %v742 = vpack.c.b16 %v627, %v626
  %v743 = vpack.c.b16 %v629, %v628
  %v744 = vpack.c.b16 %v631, %v630
  %v745 = vpack.c.b16 %v633, %v632
  %v746 = vpack.c.b16 %v635, %v634
  %v747 = vpack.c.b16 %v637, %v636
  %v748 = vpack.c.b16 %v639, %v638
  %v749 = vpack.c.b16 %v641, %v640
  %v750 = vpack.c.b16 %v643, %v642
  %v751 = vpack.c.b16 %v645, %v644
  %v752 = vpack.c.b16 %v647, %v646
  %v753 = vpack.c.b16 %v649, %v648
  %v754 = vpack.c.b16 %v651, %v650
  %v755 = vpack.c.b16 %v653, %v652
  %v756 = vpack.c.b16 %v655, %v654
  %v757 = vpack.c.b16 %v657, %v656
  %v758 = vpack.c.b16 %v659, %v658
  %v759 = vpack.c.b16 %v661, %v660
  %v760 = vpack.c.b16 %v663, %v662
  %v761 = vpack.c.b16 %v665, %v664
  %v762 = vpack.c.b16 %v667, %v666
  %v763 = vpack.c.b16 %v669, %v668
  %v764 = vpack.c.b16 %v671, %v670
  %v765 = vpack.c.b16 %v673, %v672
  %v766 = vpack.c.b16 %v675, %v674
  %v767 = vpack.c.b16 %v677, %v676
  %v768 = vpack.c.b16 %v679, %v678
  %v769 = vpack.c.b16 %v681, %v680
  %858 = vmatpush.bf16.msra.mxu0 %v689
  %859 = vmatpush.bf16.msra.mxu0 %v688
  %860 = vmatpush.bf16.msra.mxu0 %v687
  %861 = vmatpush.bf16.msra.mxu0 %v686
  %862 = vmatpush.bf16.msra.mxu0 %v685
  %863 = vmatpush.bf16.msra.mxu0 %v684
  %864 = vmatpush.bf16.msra.mxu0 %v683
  %865 = vmatpush.bf16.msra.mxu0 %v682
  %866 = vmatmul.bf16.gmra.mxu0 %v286
  %v867 = vpop.f32.mrf.mxu0
  %v868 = vadd.f32 %v216, %v867
  %v869 = vpop.f32.mrf.mxu0
  %v870 = vadd.f32 %v216, %v869
  %871 = vmatmul.bf16.gmra.mxu0 %v297
  %v872 = vpop.f32.mrf.mxu0
  %v873 = vadd.f32 %v216, %v872
  %v874 = vpop.f32.mrf.mxu0
  %v875 = vadd.f32 %v216, %v874
  %876 = vdwg.mxu0
  %877 = vmatpush.bf16.msra.mxu0 %v697
  %878 = vmatpush.bf16.msra.mxu0 %v696
  %879 = vmatpush.bf16.msra.mxu0 %v695
  %880 = vmatpush.bf16.msra.mxu0 %v694
  %881 = vmatpush.bf16.msra.mxu0 %v693
  %882 = vmatpush.bf16.msra.mxu0 %v692
  %883 = vmatpush.bf16.msra.mxu0 %v691
  %884 = vmatpush.bf16.msra.mxu0 %v690
  %885 = vmatmul.bf16.gmra.mxu0 %v287
  %v886 = vpop.f32.mrf.mxu0
  %v887 = vadd.f32 %v868, %v886
  %v888 = vpop.f32.mrf.mxu0
  %v889 = vadd.f32 %v870, %v888
  %890 = vmatmul.bf16.gmra.mxu0 %v298
  %v891 = vpop.f32.mrf.mxu0
  %v892 = vadd.f32 %v873, %v891
  %v893 = vpop.f32.mrf.mxu0
  %v894 = vadd.f32 %v875, %v893
  %895 = vdwg.mxu0
  %896 = vmatpush.bf16.msra.mxu0 %v705
  %897 = vmatpush.bf16.msra.mxu0 %v704
  %898 = vmatpush.bf16.msra.mxu0 %v703
  %899 = vmatpush.bf16.msra.mxu0 %v702
  %900 = vmatpush.bf16.msra.mxu0 %v701
  %901 = vmatpush.bf16.msra.mxu0 %v700
  %902 = vmatpush.bf16.msra.mxu0 %v699
  %903 = vmatpush.bf16.msra.mxu0 %v698
  %904 = vmatmul.bf16.gmra.mxu0 %v288
  %v905 = vpop.f32.mrf.mxu0
  %v906 = vadd.f32 %v887, %v905
  %v907 = vpop.f32.mrf.mxu0
  %v908 = vadd.f32 %v889, %v907
  %909 = vmatmul.bf16.gmra.mxu0 %v299
  %v910 = vpop.f32.mrf.mxu0
  %v911 = vadd.f32 %v892, %v910
  %v912 = vpop.f32.mrf.mxu0
  %v913 = vadd.f32 %v894, %v912
  %914 = vdwg.mxu0
  %915 = vmatpush.bf16.msra.mxu0 %v713
  %916 = vmatpush.bf16.msra.mxu0 %v712
  %917 = vmatpush.bf16.msra.mxu0 %v711
  %918 = vmatpush.bf16.msra.mxu0 %v710
  %919 = vmatpush.bf16.msra.mxu0 %v709
  %920 = vmatpush.bf16.msra.mxu0 %v708
  %921 = vmatpush.bf16.msra.mxu0 %v707
  %922 = vmatpush.bf16.msra.mxu0 %v706
  %923 = vmatmul.bf16.gmra.mxu0 %v289
  %v924 = vpop.f32.mrf.mxu0
  %v925 = vadd.f32 %v906, %v924
  %v926 = vpop.f32.mrf.mxu0
  %v927 = vadd.f32 %v908, %v926
  %928 = vmatmul.bf16.gmra.mxu0 %v300
  %v929 = vpop.f32.mrf.mxu0
  %v930 = vadd.f32 %v911, %v929
  %v931 = vpop.f32.mrf.mxu0
  %v932 = vadd.f32 %v913, %v931
  %933 = vdwg.mxu0
  %934 = vmatpush.bf16.msra.mxu0 %v721
  %935 = vmatpush.bf16.msra.mxu0 %v720
  %936 = vmatpush.bf16.msra.mxu0 %v719
  %937 = vmatpush.bf16.msra.mxu0 %v718
  %938 = vmatpush.bf16.msra.mxu0 %v717
  %939 = vmatpush.bf16.msra.mxu0 %v716
  %940 = vmatpush.bf16.msra.mxu0 %v715
  %941 = vmatpush.bf16.msra.mxu0 %v714
  %942 = vmatmul.bf16.gmra.mxu0 %v290
  %v943 = vpop.f32.mrf.mxu0
  %v944 = vadd.f32 %v925, %v943
  %v945 = vpop.f32.mrf.mxu0
  %v946 = vadd.f32 %v927, %v945
  %947 = vmatmul.bf16.gmra.mxu0 %v301
  %v948 = vpop.f32.mrf.mxu0
  %v949 = vadd.f32 %v930, %v948
  %v950 = vpop.f32.mrf.mxu0
  %v951 = vadd.f32 %v932, %v950
  %952 = vdwg.mxu0
  %953 = vmatpush.bf16.msra.mxu0 %v729
  %954 = vmatpush.bf16.msra.mxu0 %v728
  %955 = vmatpush.bf16.msra.mxu0 %v727
  %956 = vmatpush.bf16.msra.mxu0 %v726
  %957 = vmatpush.bf16.msra.mxu0 %v725
  %958 = vmatpush.bf16.msra.mxu0 %v724
  %959 = vmatpush.bf16.msra.mxu0 %v723
  %960 = vmatpush.bf16.msra.mxu0 %v722
  %961 = vmatmul.bf16.gmra.mxu0 %v291
  %v962 = vpop.f32.mrf.mxu0
  %v963 = vadd.f32 %v944, %v962
  %v964 = vpop.f32.mrf.mxu0
  %v965 = vadd.f32 %v946, %v964
  %966 = vmatmul.bf16.gmra.mxu0 %v302
  %v967 = vpop.f32.mrf.mxu0
  %v968 = vadd.f32 %v949, %v967
  %v969 = vpop.f32.mrf.mxu0
  %v970 = vadd.f32 %v951, %v969
  %971 = vdwg.mxu0
  %972 = vmatpush.bf16.msra.mxu0 %v737
  %973 = vmatpush.bf16.msra.mxu0 %v736
  %974 = vmatpush.bf16.msra.mxu0 %v735
  %975 = vmatpush.bf16.msra.mxu0 %v734
  %976 = vmatpush.bf16.msra.mxu0 %v733
  %977 = vmatpush.bf16.msra.mxu0 %v732
  %978 = vmatpush.bf16.msra.mxu0 %v731
  %979 = vmatpush.bf16.msra.mxu0 %v730
  %980 = vmatmul.bf16.gmra.mxu0 %v292
  %v981 = vpop.f32.mrf.mxu0
  %v982 = vadd.f32 %v963, %v981
  %v983 = vpop.f32.mrf.mxu0
  %v984 = vadd.f32 %v965, %v983
  %985 = vmatmul.bf16.gmra.mxu0 %v303
  %v986 = vpop.f32.mrf.mxu0
  %v987 = vadd.f32 %v968, %v986
  %v988 = vpop.f32.mrf.mxu0
  %v989 = vadd.f32 %v970, %v988
  %990 = vdwg.mxu0
  %991 = vmatpush.bf16.msra.mxu0 %v745
  %992 = vmatpush.bf16.msra.mxu0 %v744
  %993 = vmatpush.bf16.msra.mxu0 %v743
  %994 = vmatpush.bf16.msra.mxu0 %v742
  %995 = vmatpush.bf16.msra.mxu0 %v741
  %996 = vmatpush.bf16.msra.mxu0 %v740
  %997 = vmatpush.bf16.msra.mxu0 %v739
  %998 = vmatpush.bf16.msra.mxu0 %v738
  %999 = vmatmul.bf16.gmra.mxu0 %v293
  %v1000 = vpop.f32.mrf.mxu0
  %v1001 = vadd.f32 %v982, %v1000
  %v1002 = vpop.f32.mrf.mxu0
  %v1003 = vadd.f32 %v984, %v1002
  %1004 = vmatmul.bf16.gmra.mxu0 %v304
  %v1005 = vpop.f32.mrf.mxu0
  %v1006 = vadd.f32 %v987, %v1005
  %v1007 = vpop.f32.mrf.mxu0
  %v1008 = vadd.f32 %v989, %v1007
  %1009 = vdwg.mxu0
  %1010 = vmatpush.bf16.msra.mxu0 %v753
  %1011 = vmatpush.bf16.msra.mxu0 %v752
  %1012 = vmatpush.bf16.msra.mxu0 %v751
  %1013 = vmatpush.bf16.msra.mxu0 %v750
  %1014 = vmatpush.bf16.msra.mxu0 %v749
  %1015 = vmatpush.bf16.msra.mxu0 %v748
  %1016 = vmatpush.bf16.msra.mxu0 %v747
  %1017 = vmatpush.bf16.msra.mxu0 %v746
  %1018 = vmatmul.bf16.gmra.mxu0 %v294
  %v1019 = vpop.f32.mrf.mxu0
  %v1020 = vadd.f32 %v1001, %v1019
  %v1021 = vpop.f32.mrf.mxu0
  %v1022 = vadd.f32 %v1003, %v1021
  %1023 = vmatmul.bf16.gmra.mxu0 %v305
  %v1024 = vpop.f32.mrf.mxu0
  %v1025 = vadd.f32 %v1006, %v1024
  %v1026 = vpop.f32.mrf.mxu0
  %v1027 = vadd.f32 %v1008, %v1026
  %1028 = vdwg.mxu0
  %1029 = vmatpush.bf16.msra.mxu0 %v761
  %1030 = vmatpush.bf16.msra.mxu0 %v760
  %1031 = vmatpush.bf16.msra.mxu0 %v759
  %1032 = vmatpush.bf16.msra.mxu0 %v758
  %1033 = vmatpush.bf16.msra.mxu0 %v757
  %1034 = vmatpush.bf16.msra.mxu0 %v756
  %1035 = vmatpush.bf16.msra.mxu0 %v755
  %1036 = vmatpush.bf16.msra.mxu0 %v754
  %1037 = vmatmul.bf16.gmra.mxu0 %v295
  %v1038 = vpop.f32.mrf.mxu0
  %v1039 = vadd.f32 %v1020, %v1038
  %v1040 = vpop.f32.mrf.mxu0
  %v1041 = vadd.f32 %v1022, %v1040
  %1042 = vmatmul.bf16.gmra.mxu0 %v306
  %v1043 = vpop.f32.mrf.mxu0
  %v1044 = vadd.f32 %v1025, %v1043
  %v1045 = vpop.f32.mrf.mxu0
  %v1046 = vadd.f32 %v1027, %v1045
  %1047 = vdwg.mxu0
  %1048 = vmatpush.bf16.msra.mxu0 %v769
  %1049 = vmatpush.bf16.msra.mxu0 %v768
  %1050 = vmatpush.bf16.msra.mxu0 %v767
  %1051 = vmatpush.bf16.msra.mxu0 %v766
  %1052 = vmatpush.bf16.msra.mxu0 %v765
  %1053 = vmatpush.bf16.msra.mxu0 %v764
  %1054 = vmatpush.bf16.msra.mxu0 %v763
  %1055 = vmatpush.bf16.msra.mxu0 %v762
  %1056 = vmatmul.bf16.gmra.mxu0 %v296
  %v1057 = vpop.f32.mrf.mxu0
  %v1058 = vadd.f32 %v1039, %v1057
  %v1059 = vpop.f32.mrf.mxu0
  %v1060 = vadd.f32 %v1041, %v1059
  %1061 = vmatmul.bf16.gmra.mxu0 %v307
  %v1062 = vpop.f32.mrf.mxu0
  %v1063 = vadd.f32 %v1044, %v1062
  %v1064 = vpop.f32.mrf.mxu0
  %v1065 = vadd.f32 %v1046, %v1064
  %1066 = vdwg.mxu0
  %1067 = vst [vmem:[%s3] sm:$0xff] %v1058
  %1068 = vst [vmem:[%s3 + $0x8] sm:$0xff] %v1060
  %1069 = vst [vmem:[%s3 + $0x10] sm:$0xff] %v1063
  %1070 = vst [vmem:[%s3 + $0x18] sm:$0xff] %v1065
  // Predicated region
  $region14: #{cnn_forward.1} parent=0 // pred_check
    _
  $region15: #{cnn_forward.1} parent=0 // pred_check_branch
    %1072 = sbr.rel (0) target = $region17
  $region16: #{cnn_forward.1} parent=0 // pred_region
    _
  $region17: #{cnn_forward.1} parent=0 // pred_fallthru
    _
  // Predicated region
  $region18: #{cnn_forward.1} parent=0 // pred_check
    _
  $region19: #{cnn_forward.1} parent=0 // pred_check_branch
    %1074 = sbr.rel (0) target = $region21
  $region20: #{cnn_forward.1} parent=0 // pred_region
    _
  $region21: #{cnn_forward.1} parent=0 // pred_fallthru
    _

</llo_original>
